<compile_context>
chip_gen: v7x
topology: tpu7x:2x2x1
jax: 0.10.0
libtpu: 0.0.40
codegen_flags: <defaults>
</compile_context>

<pallas_src>
import functools

import jax
import jax.numpy as jnp
from jax import lax
from jax.experimental import pallas as pl
from jax.experimental.pallas import tpu as pltpu


def _round_up(x: int, m: int) -> int:
    return ((x + m - 1) // m) * m


def _barlow_twins_kernel(x1_ref, x2_ref, loss_ref, s_acc, stats, *,
                         lambd, eps, n_true, d_true):
    j = pl.program_id(0)      # output column block (parallel)
    i = pl.program_id(1)      # node tile (reduction, arbitrary)
    dp, bd = s_acc.shape

    @pl.when(i == 0)
    def _init():
        s_acc[...] = jnp.zeros_like(s_acc)
        stats[...] = jnp.zeros_like(stats)

    x1 = x1_ref[...]                          # bf16 (tile_n, dp)
    x2 = x2_ref[...]                          # bf16 (tile_n, bd)
    x1f = x1.astype(jnp.float32)
    x2f = x2.astype(jnp.float32)

    # Column first/second moments in f32 (rows 0-3 of one merged scratch);
    # zero padding rows contribute nothing.
    stats[0:1, :] += jnp.sum(x1f, axis=0, keepdims=True)
    stats[1:2, :] += jnp.sum(x1f * x1f, axis=0, keepdims=True)
    stats[2:3, 0:bd] += jnp.sum(x2f, axis=0, keepdims=True)
    stats[3:4, 0:bd] += jnp.sum(x2f * x2f, axis=0, keepdims=True)

    # S += X1_t^T @ X2_t : contract the node axis directly (no transposed
    # intermediate); bf16 MXU operands + f32 accumulator.
    s_acc[...] += lax.dot_general(
        x1, x2, dimension_numbers=(((0,), (0,)), ((), ())),
        preferred_element_type=jnp.float32)

    @pl.when(i == pl.num_programs(1) - 1)
    def _finalize():
        inv_n = 1.0 / n_true
        m1 = stats[0:1, :] * inv_n                 # (1, dp)
        m2 = stats[2:3, 0:bd] * inv_n              # (1, bd)
        # Single-pass biased variance, clamped >= 0 (f32 cancellation can push
        # it below -eps for |mean| >> std, which would NaN the rsqrt).
        var1 = jnp.maximum(stats[1:2, :] * inv_n - m1 * m1, 0.0)
        var2 = jnp.maximum(stats[3:4, 0:bd] * inv_n - m2 * m2, 0.0)
        d1 = lax.rsqrt(var1 + eps) * inv_n         # fold 1/N into left scale
        d2 = lax.rsqrt(var2 + eps)

        m1_col = jnp.transpose(m1)                 # (dp, 1)
        d1_col = jnp.transpose(d1)
        # C_block = D1 (S - N m1 m2^T) D2 / N   (1/N already inside d1)
        c = (s_acc[...] - n_true * (m1_col * m2)) * d1_col * d2

        row = lax.broadcasted_iota(jnp.int32, (dp, bd), 0)
        col = lax.broadcasted_iota(jnp.int32, (dp, bd), 1) + j * bd
        # Identity restricted to the true feature count (padded rows/cols -> 0).
        eye = jnp.logical_and(row == col, col < d_true).astype(jnp.float32)

        # on_diag + lambd * off_diag == sum((lambd + (1-lambd) I) * (C - I)^2)
        w = lambd + (1.0 - lambd) * eye
        diff = c - eye
        loss_ref[0, 0] = jnp.sum(w * diff * diff)


def barlow_twins_loss(x1, x2, lambd: float, eps: float = 1e-5,
                      max_tile_n: int = 2048):
    num_nodes, z_dim = x1.shape
    assert x2.shape == (num_nodes, z_dim)

    # Generation-aware VMEM target (~75% of per-core capacity).
    try:
        vmem_cap = int(pltpu.get_tpu_info().vmem_capacity_bytes)
    except Exception:
        vmem_cap = 64 << 20                        # conservative (v7x per-TC)
    target_vmem = (vmem_cap * 3) // 4

    d_pad = _round_up(z_dim, 128)                  # lane-dense feature dim

    # Column block of the (D, D) accumulator: full width when it fits ~1/3 of
    # the target VMEM, otherwise <=512-lane blocks (also the v7x 2-TC split).
    s_budget = target_vmem // 3
    blk = (s_budget // (d_pad * 4)) // 128 * 128
    if blk >= d_pad:
        block_d = d_pad
    else:
        block_d = max(128, min(blk, 512))
        d_pad = _round_up(d_pad, block_d)
    num_col_blocks = d_pad // block_d

    # Node tile: double-buffered bf16 X1 (d_pad wide) + X2 (block_d wide)
    # tiles fill what is left after the accumulator + stats + headroom.
    in_budget = target_vmem - d_pad * block_d * 4 - 8 * d_pad * 4 - (4 << 20)
    per_row = 2 * 2 * (d_pad + block_d)            # 2 pipeline bufs x 2 bytes
    tile_n = max(8, in_budget // per_row)
    tile_n = max(8, min((tile_n // 8) * 8, max_tile_n, _round_up(num_nodes, 8)))
    n_pad = _round_up(num_nodes, tile_n)

    # bf16 HBM stream (mem-bound regime: halves bytes); zero rows/cols of the
    # padding contribute nothing to the accumulated statistics.
    x1 = x1.astype(jnp.bfloat16)
    x2 = x2.astype(jnp.bfloat16)
    pad_n, pad_d = n_pad - num_nodes, d_pad - z_dim
    if pad_n or pad_d:
        x1 = jnp.pad(x1, ((0, pad_n), (0, pad_d)))
        x2 = jnp.pad(x2, ((0, pad_n), (0, pad_d)))

    grid = (num_col_blocks, n_pad // tile_n)       # reduction axis last

    kernel = functools.partial(
        _barlow_twins_kernel,
        lambd=float(lambd), eps=float(eps),
        n_true=float(num_nodes), d_true=int(z_dim))

    est = (2 * 2 * tile_n * (d_pad + block_d)      # double-buffered bf16 inputs
           + d_pad * block_d * 4                   # S accumulator
           + 8 * d_pad * 4)                        # merged column stats
    vmem_limit = int(min(max(est + (8 << 20), 32 << 20), target_vmem))

    partial = pl.pallas_call(
        kernel,
        out_shape=jax.ShapeDtypeStruct((num_col_blocks, 1), jnp.float32),
        grid=grid,
        in_specs=[
            pl.BlockSpec((tile_n, d_pad), lambda j, i: (i, 0)),
            pl.BlockSpec((tile_n, block_d), lambda j, i: (i, j)),
        ],
        out_specs=pl.BlockSpec((1, 1), lambda j, i: (j, 0),
                               memory_space=pltpu.SMEM),
        scratch_shapes=[
            pltpu.VMEM((d_pad, block_d), jnp.float32),   # S accumulator block
            pltpu.VMEM((8, d_pad), jnp.float32),         # merged column stats
        ],
        compiler_params=pltpu.CompilerParams(
            dimension_semantics=("parallel", "arbitrary"),
            vmem_limit_bytes=vmem_limit),
    )(x1, x2)
    return jnp.sum(partial)


def _reference_loss(x1, x2, lambd, eps=1e-5):
    def bn(x):
        m = jnp.mean(x, axis=0, keepdims=True)
        v = jnp.mean((x - m) ** 2, axis=0, keepdims=True)
        return (x - m) / jnp.sqrt(v + eps)

    n, d = x1.shape
    z1, z2 = bn(x1), bn(x2)
    c = jnp.einsum("nd,ne->de", z1, z2,
                   precision=lax.Precision.HIGHEST) / n
    on_diag = jnp.sum((jnp.diag(c) - 1.0) ** 2)
    off_diag = jnp.sum(c ** 2) - jnp.sum(jnp.diag(c) ** 2)
    return on_diag + lambd * off_diag


if __name__ == "__main__":
    key = jax.random.PRNGKey(0)
    k1, k2, k3, k4 = jax.random.split(key, 4)
    lambd = 0.005

    # Case 1: the module's toy shape (single tile, padded lanes).
    num_nodes, z_dim = 16, 32
    x1 = jax.random.normal(k1, (num_nodes, z_dim), dtype=jnp.float32)
    x2 = jax.random.normal(k2, (num_nodes, z_dim), dtype=jnp.float32)
    loss = jax.block_until_ready(barlow_twins_loss(x1, x2, lambd))
    ref = _reference_loss(x1, x2, lambd)
    # bf16 HBM stream / MXU operands (f32 accumulation) -> small slack vs f32.
    assert jnp.allclose(loss, ref, rtol=1e-2, atol=1e-2), (loss, ref)

    # Case 2: non-aligned shape, forced multi-tile streaming over nodes.
    num_nodes, z_dim = 300, 200
    y1 = jax.random.normal(k3, (num_nodes, z_dim), dtype=jnp.float32)
    y2 = jax.random.normal(k4, (num_nodes, z_dim), dtype=jnp.float32)
    loss2 = jax.block_until_ready(
        barlow_twins_loss(y1, y2, lambd, max_tile_n=128))
    ref2 = _reference_loss(y1, y2, lambd)
    assert jnp.allclose(loss2, ref2, rtol=1e-2, atol=1e-2), (loss2, ref2)

    print("KERNEL_OK")
</pallas_src>

<mosaic_0001>
module attributes {stable_mosaic.version = 11 : i64} {
  func.func @_barlow_twins_kernel(%arg0: i32, %arg1: i32, %arg2: memref<16x128xbf16, #tpu.memory_space<vmem>>, %arg3: memref<16x128xbf16, #tpu.memory_space<vmem>>, %arg4: memref<1x1xf32, #tpu.memory_space<smem>>, %arg5: memref<128x128xf32, #tpu.memory_space<vmem>>, %arg6: memref<8x128xf32, #tpu.memory_space<vmem>>) attributes {dimension_semantics = [#tpu.dimension_semantics<parallel>, #tpu.dimension_semantics<arbitrary>], iteration_bounds = array<i64: 1, 1>, scalar_prefetch = 0 : i64, scratch_operands = 2 : i64, tpu.core_type = #tpu.core_type<tc>, window_params = [{transform_indices = @transform_0, window_bounds = array<i64: 16, 128>}, {transform_indices = @transform_1, window_bounds = array<i64: 16, 128>}, {transform_indices = @transform_2, window_bounds = array<i64: 1, 1>}]} {
    %c0_i32 = arith.constant 0 : i32
    %0 = arith.cmpi eq, %arg1, %c0_i32 : i32
    %1 = arith.extui %0 : i1 to i32
    %c0_i32_0 = arith.constant 0 : i32
    %2 = arith.cmpi ne, %1, %c0_i32_0 : i32
    scf.if %2 {
      %cst_27 = arith.constant 0.000000e+00 : f32
      %36 = vector.broadcast %cst_27 : f32 to vector<128x128xf32>
      %c0_28 = arith.constant 0 : index
      %c0_29 = arith.constant 0 : index
      %37 = vector.load %arg5[%c0_28, %c0_29] : memref<128x128xf32, #tpu.memory_space<vmem>>, vector<128x128xf32>
      tpu.vector_store %arg5[%c0_28, %c0_29], %36 {strides = array<i32>} : memref<128x128xf32, #tpu.memory_space<vmem>>, vector<128x128xf32>,
      %cst_30 = arith.constant 0.000000e+00 : f32
      %38 = vector.broadcast %cst_30 : f32 to vector<8x128xf32>
      %c0_31 = arith.constant 0 : index
      %c0_32 = arith.constant 0 : index
      %39 = vector.load %arg6[%c0_31, %c0_32] : memref<8x128xf32, #tpu.memory_space<vmem>>, vector<8x128xf32>
      tpu.vector_store %arg6[%c0_31, %c0_32], %38 {strides = array<i32>} : memref<8x128xf32, #tpu.memory_space<vmem>>, vector<8x128xf32>,
    } else {
    }
    %c0 = arith.constant 0 : index
    %c0_1 = arith.constant 0 : index
    %3 = vector.load %arg2[%c0, %c0_1] : memref<16x128xbf16, #tpu.memory_space<vmem>>, vector<16x128xbf16>
    %c0_2 = arith.constant 0 : index
    %c0_3 = arith.constant 0 : index
    %4 = vector.load %arg3[%c0_2, %c0_3] : memref<16x128xbf16, #tpu.memory_space<vmem>>, vector<16x128xbf16>
    %5 = arith.extf %3 : vector<16x128xbf16> to vector<16x128xf32>
    %6 = arith.extf %4 : vector<16x128xbf16> to vector<16x128xf32>
    %c0_4 = arith.constant 0 : index
    %c0_5 = arith.constant 0 : index
    %7 = vector.load %arg6[%c0_4, %c0_5] : memref<8x128xf32, #tpu.memory_space<vmem>>, vector<1x128xf32>
    %cst = arith.constant dense<0.000000e+00> : vector<128xf32>
    %8 = vector.multi_reduction <add>, %5, %cst [0] : vector<16x128xf32> to vector<128xf32>
    %9 = vector.shape_cast %8 : vector<128xf32> to vector<1x128xf32>
    %10 = arith.addf %7, %9 : vector<1x128xf32>
    %c0_6 = arith.constant 0 : index
    %c0_7 = arith.constant 0 : index
    %11 = vector.load %arg6[%c0_6, %c0_7] : memref<8x128xf32, #tpu.memory_space<vmem>>, vector<1x128xf32>
    tpu.vector_store %arg6[%c0_6, %c0_7], %10 {strides = array<i32>} : memref<8x128xf32, #tpu.memory_space<vmem>>, vector<1x128xf32>,
    %c1 = arith.constant 1 : index
    %c0_8 = arith.constant 0 : index
    %12 = vector.load %arg6[%c1, %c0_8] : memref<8x128xf32, #tpu.memory_space<vmem>>, vector<1x128xf32>
    %13 = arith.mulf %5, %5 : vector<16x128xf32>
    %cst_9 = arith.constant dense<0.000000e+00> : vector<128xf32>
    %14 = vector.multi_reduction <add>, %13, %cst_9 [0] : vector<16x128xf32> to vector<128xf32>
    %15 = vector.shape_cast %14 : vector<128xf32> to vector<1x128xf32>
    %16 = arith.addf %12, %15 : vector<1x128xf32>
    %c1_10 = arith.constant 1 : index
    %c0_11 = arith.constant 0 : index
    %17 = vector.load %arg6[%c1_10, %c0_11] : memref<8x128xf32, #tpu.memory_space<vmem>>, vector<1x128xf32>
    tpu.vector_store %arg6[%c1_10, %c0_11], %16 {strides = array<i32>} : memref<8x128xf32, #tpu.memory_space<vmem>>, vector<1x128xf32>,
    %c2 = arith.constant 2 : index
    %c0_12 = arith.constant 0 : index
    %18 = vector.load %arg6[%c2, %c0_12] : memref<8x128xf32, #tpu.memory_space<vmem>>, vector<1x128xf32>
    %cst_13 = arith.constant dense<0.000000e+00> : vector<128xf32>
    %19 = vector.multi_reduction <add>, %6, %cst_13 [0] : vector<16x128xf32> to vector<128xf32>
    %20 = vector.shape_cast %19 : vector<128xf32> to vector<1x128xf32>
    %21 = arith.addf %18, %20 : vector<1x128xf32>
    %c2_14 = arith.constant 2 : index
    %c0_15 = arith.constant 0 : index
    %22 = vector.load %arg6[%c2_14, %c0_15] : memref<8x128xf32, #tpu.memory_space<vmem>>, vector<1x128xf32>
    tpu.vector_store %arg6[%c2_14, %c0_15], %21 {strides = array<i32>} : memref<8x128xf32, #tpu.memory_space<vmem>>, vector<1x128xf32>,
    %c3 = arith.constant 3 : index
    %c0_16 = arith.constant 0 : index
    %23 = vector.load %arg6[%c3, %c0_16] : memref<8x128xf32, #tpu.memory_space<vmem>>, vector<1x128xf32>
    %24 = arith.mulf %6, %6 : vector<16x128xf32>
    %cst_17 = arith.constant dense<0.000000e+00> : vector<128xf32>
    %25 = vector.multi_reduction <add>, %24, %cst_17 [0] : vector<16x128xf32> to vector<128xf32>
    %26 = vector.shape_cast %25 : vector<128xf32> to vector<1x128xf32>
    %27 = arith.addf %23, %26 : vector<1x128xf32>
    %c3_18 = arith.constant 3 : index
    %c0_19 = arith.constant 0 : index
    %28 = vector.load %arg6[%c3_18, %c0_19] : memref<8x128xf32, #tpu.memory_space<vmem>>, vector<1x128xf32>
    tpu.vector_store %arg6[%c3_18, %c0_19], %27 {strides = array<i32>} : memref<8x128xf32, #tpu.memory_space<vmem>>, vector<1x128xf32>,
    %c0_20 = arith.constant 0 : index
    %c0_21 = arith.constant 0 : index
    %29 = vector.load %arg5[%c0_20, %c0_21] : memref<128x128xf32, #tpu.memory_space<vmem>>, vector<128x128xf32>
    %cst_22 = arith.constant dense<0.000000e+00> : vector<128x128xf32>
    %30 = tpu.matmul %3, %4, %cst_22 {dimension_numbers = #tpu.dot_dimension_numbers<[0], [0], [1], [1], [0, 1, 1, 1], [], []>} : vector<16x128xbf16>, vector<16x128xbf16>, vector<128x128xf32> -> vector<128x128xf32>
    %31 = arith.addf %29, %30 : vector<128x128xf32>
    %c0_23 = arith.constant 0 : index
    %c0_24 = arith.constant 0 : index
    %32 = vector.load %arg5[%c0_23, %c0_24] : memref<128x128xf32, #tpu.memory_space<vmem>>, vector<128x128xf32>
    tpu.vector_store %arg5[%c0_23, %c0_24], %31 {strides = array<i32>} : memref<128x128xf32, #tpu.memory_space<vmem>>, vector<128x128xf32>,
    %c0_i32_25 = arith.constant 0 : i32
    %33 = arith.cmpi eq, %arg1, %c0_i32_25 : i32
    %34 = arith.extui %33 : i1 to i32
    %c0_i32_26 = arith.constant 0 : i32
    %35 = arith.cmpi ne, %34, %c0_i32_26 : i32
    scf.if %35 {
      %c0_27 = arith.constant 0 : index
      %c0_28 = arith.constant 0 : index
      %36 = vector.load %arg6[%c0_27, %c0_28] : memref<8x128xf32, #tpu.memory_space<vmem>>, vector<1x128xf32>
      %cst_29 = arith.constant 6.250000e-02 : f32
      %37 = vector.broadcast %cst_29 : f32 to vector<1x128xf32>
      %38 = arith.mulf %36, %37 : vector<1x128xf32>
      %c2_30 = arith.constant 2 : index
      %c0_31 = arith.constant 0 : index
      %39 = vector.load %arg6[%c2_30, %c0_31] : memref<8x128xf32, #tpu.memory_space<vmem>>, vector<1x128xf32>
      %cst_32 = arith.constant 6.250000e-02 : f32
      %40 = vector.broadcast %cst_32 : f32 to vector<1x128xf32>
      %41 = arith.mulf %39, %40 : vector<1x128xf32>
      %c1_33 = arith.constant 1 : index
      %c0_34 = arith.constant 0 : index
      %42 = vector.load %arg6[%c1_33, %c0_34] : memref<8x128xf32, #tpu.memory_space<vmem>>, vector<1x128xf32>
      %cst_35 = arith.constant 6.250000e-02 : f32
      %43 = vector.broadcast %cst_35 : f32 to vector<1x128xf32>
      %44 = arith.mulf %42, %43 : vector<1x128xf32>
      %45 = arith.mulf %38, %38 : vector<1x128xf32>
      %46 = arith.subf %44, %45 : vector<1x128xf32>
      %cst_36 = arith.constant 0.000000e+00 : f32
      %47 = vector.broadcast %cst_36 : f32 to vector<1x128xf32>
      %48 = arith.maximumf %46, %47 : vector<1x128xf32>
      %c3_37 = arith.constant 3 : index
      %c0_38 = arith.constant 0 : index
      %49 = vector.load %arg6[%c3_37, %c0_38] : memref<8x128xf32, #tpu.memory_space<vmem>>, vector<1x128xf32>
      %cst_39 = arith.constant 6.250000e-02 : f32
      %50 = vector.broadcast %cst_39 : f32 to vector<1x128xf32>
      %51 = arith.mulf %49, %50 : vector<1x128xf32>
      %52 = arith.mulf %41, %41 : vector<1x128xf32>
      %53 = arith.subf %51, %52 : vector<1x128xf32>
      %cst_40 = arith.constant 0.000000e+00 : f32
      %54 = vector.broadcast %cst_40 : f32 to vector<1x128xf32>
      %55 = arith.maximumf %53, %54 : vector<1x128xf32>
      %cst_41 = arith.constant 9.99999974E-6 : f32
      %56 = vector.broadcast %cst_41 : f32 to vector<1x128xf32>
      %57 = arith.addf %48, %56 : vector<1x128xf32>
      %58 = math.rsqrt %57 : vector<1x128xf32>
      %cst_42 = arith.constant 6.250000e-02 : f32
      %59 = vector.broadcast %cst_42 : f32 to vector<1x128xf32>
      %60 = arith.mulf %58, %59 : vector<1x128xf32>
      %cst_43 = arith.constant 9.99999974E-6 : f32
      %61 = vector.broadcast %cst_43 : f32 to vector<1x128xf32>
      %62 = arith.addf %55, %61 : vector<1x128xf32>
      %63 = math.rsqrt %62 : vector<1x128xf32>
      %64 = tpu.transpose %38, [1, 0] : vector<1x128xf32> -> vector<128x1xf32>
      %65 = tpu.transpose %60, [1, 0] : vector<1x128xf32> -> vector<128x1xf32>
      %c0_44 = arith.constant 0 : index
      %c0_45 = arith.constant 0 : index
      %66 = vector.load %arg5[%c0_44, %c0_45] : memref<128x128xf32, #tpu.memory_space<vmem>>, vector<128x128xf32>
      %67 = vector.broadcast %64 : vector<128x1xf32> to vector<128x128xf32>
      %68 = vector.broadcast %41 : vector<1x128xf32> to vector<128x128xf32>
      %69 = arith.mulf %67, %68 : vector<128x128xf32>
      %cst_46 = arith.constant 1.600000e+01 : f32
      %70 = vector.broadcast %cst_46 : f32 to vector<128x128xf32>
      %71 = arith.mulf %70, %69 : vector<128x128xf32>
      %72 = arith.subf %66, %71 : vector<128x128xf32>
      %73 = vector.broadcast %65 : vector<128x1xf32> to vector<128x128xf32>
      %74 = arith.mulf %72, %73 : vector<128x128xf32>
      %75 = vector.broadcast %63 : vector<1x128xf32> to vector<128x128xf32>
      %76 = arith.mulf %74, %75 : vector<128x128xf32>
      %77 = tpu.iota {dimensions = array<i32: 0>} : vector<128x128xi32>
      %78 = tpu.iota {dimensions = array<i32: 1>} : vector<128x128xi32>
      %c128_i32 = arith.constant 128 : i32
      %79 = arith.muli %arg0, %c128_i32 : i32
      %80 = vector.broadcast %79 : i32 to vector<128x128xi32>
      %81 = arith.addi %78, %80 : vector<128x128xi32>
      %82 = arith.cmpi eq, %77, %81 : vector<128x128xi32>
      %c32_i32 = arith.constant 32 : i32
      %83 = vector.broadcast %c32_i32 : i32 to vector<128x128xi32>
      %84 = arith.cmpi slt, %81, %83 : vector<128x128xi32>
      %85 = arith.andi %82, %84 : vector<128x128xi1>
      %86 = arith.extui %85 : vector<128x128xi1> to vector<128x128xi32>
      %87 = arith.sitofp %86 : vector<128x128xi32> to vector<128x128xf32>
      %cst_47 = arith.constant 9.950000e-01 : f32
      %88 = vector.broadcast %cst_47 : f32 to vector<128x128xf32>
      %89 = arith.mulf %88, %87 : vector<128x128xf32>
      %cst_48 = arith.constant 5.000000e-03 : f32
      %90 = vector.broadcast %cst_48 : f32 to vector<128x128xf32>
      %91 = arith.addf %90, %89 : vector<128x128xf32>
      %92 = arith.subf %76, %87 : vector<128x128xf32>
      %93 = arith.mulf %91, %92 : vector<128x128xf32>
      %94 = arith.mulf %93, %92 : vector<128x128xf32>
      %95 = vector.shape_cast %94 : vector<128x128xf32> to vector<1x128x128xf32>
      %cst_49 = arith.constant dense<0.000000e+00> : vector<1xf32>
      %96 = vector.multi_reduction <add>, %95, %cst_49 [1, 2] : vector<1x128x128xf32> to vector<1xf32>
      %97 = vector.shape_cast %96 : vector<1xf32> to vector<1x1x1xf32>
      %98 = vector.extract %97[0, 0, 0] : f32 from vector<1x1x1xf32>
      %c0_50 = arith.constant 0 : index
      %c0_51 = arith.constant 0 : index
      %99 = memref.load %arg4[%c0_50, %c0_51] : memref<1x1xf32, #tpu.memory_space<smem>>
      memref.store %98, %arg4[%c0_50, %c0_51] : memref<1x1xf32, #tpu.memory_space<smem>>
    } else {
    }
    return
  }
  func.func @transform_0(%arg0: i32, %arg1: i32) -> (i32, i32) {
    %c0_i32 = arith.constant 0 : i32
    %c0_i32_0 = arith.constant 0 : i32
    return %arg1, %c0_i32 : i32, i32
  }
  func.func @transform_1(%arg0: i32, %arg1: i32) -> (i32, i32) {
    %c0_i32 = arith.constant 0 : i32
    return %arg1, %arg0 : i32, i32
  }
  func.func @transform_2(%arg0: i32, %arg1: i32) -> (i32, i32) {
    %c0_i32 = arith.constant 0 : i32
    %c0_i32_0 = arith.constant 0 : i32
    return %arg0, %c0_i32 : i32, i32
  }
}

</mosaic_0001>

<llo_original>
// kernel: tpu_custom_call.1
$region0: #{tpu_custom_call.1}
  #allocation0 [shape = 'u32[]', space=smem, size = 0x4, offset = 0x4, fixed_abs, tag = 'smem constant byte address 0x4 - core index']
  #allocation1 [shape = 'u32[144,128]{1,0:T(1,128)}', space=vmem, size = 0x12000, scoped, tag = 'internal scratch']
  #allocation2 [shape = 'f32[128,128]{1,0:T(8,128)}', space=vmem, size = 0x10000, scoped, tag = 'scratch operand']
  #allocation3 [shape = 'f32[8,128]{1,0:T(8,128)}', space=vmem, size = 0x1000, scoped, tag = 'scratch operand']
  %s0 = inlined_call_operand.hbm [shape: bf16[16,128], index: 0, kind: input, shape index: {}]
  %s1 = inlined_call_operand.hbm [shape: bf16[16,128], index: 1, kind: input, shape index: {}]
  %s2 = inlined_call_operand.hbm [shape: f32[1,1], index: 2, kind: output, shape index: {}]
  %s3 = sld [smem:[#allocation0]]
  $region34: #{tpu_custom_call.1} parent=0
    _
  %s5 = ssub.s32 1, %s3
  %s6 = scalar_select 0, %s5, %s3
  $region1: #{tpu_custom_call.1} parent=0
    #allocation4 [shape = 'u8[4096]{0}', space=vmem, size = 0x1000, scoped, tag = 'input window, operand 0, single buffered']
    #allocation5 [shape = 's32[1]{0}', space=sflag, size = 0x4, scoped, tag = 'scoped memory for tpu_custom_call.1']
    #allocation6 [shape = 's32[1]{0}', space=sflag, size = 0x4, scoped, tag = 'scoped memory for tpu_custom_call.1']
    #allocation7 [shape = 'u8[4096]{0}', space=vmem, size = 0x1000, scoped, tag = 'input window, operand 1, single buffered']
    #allocation8 [shape = 's32[1]{0}', space=sflag, size = 0x4, scoped, tag = 'scoped memory for tpu_custom_call.1']
    #allocation9 [shape = 'u8[512]{0}', space=smem, size = 0x200, scoped, tag = 'output window, operand 0, single buffered']
    %7 = vsyncpa [#allocation5], 0
    %8 = vsyncpa [#allocation8], 0
    %9 = vsyncpa [#allocation6], 0
    // Predicated region
    $region2: #{tpu_custom_call.1} parent=1 // pred_check
      _
    $region3: #{tpu_custom_call.1} parent=1 // pred_check_branch
      %11 = sbr.rel (0) target = $region5
    $region4: #{tpu_custom_call.1} parent=1 // pred_region
      %s13 = ssub.s32 128, 128
      %14 = vsyncadd [#allocation5], %s13
      %s15 = sshll.u32 [#allocation4], 4
      %s16 = int_to_ptr.vmem [resolvable:$true] %s15
      %21 = dma.hbm_to_vmem [thread:$0]  %s0, 128, %s16, [#allocation5], 64, 64, 4
    $region5: #{tpu_custom_call.1} parent=1 // pred_fallthru
      _
    // Predicated region
    $region6: #{tpu_custom_call.1} parent=1 // pred_check
      _
    $region7: #{tpu_custom_call.1} parent=1 // pred_check_branch
      %23 = sbr.rel (0) target = $region9
    $region8: #{tpu_custom_call.1} parent=1 // pred_region
      %s25 = ssub.s32 128, 128
      %26 = vsyncadd [#allocation8], %s25
      %s27 = sshll.u32 [#allocation7], 4
      %s28 = int_to_ptr.vmem [resolvable:$true] %s27
      %33 = dma.hbm_to_vmem [thread:$0]  %s1, 128, %s28, [#allocation8], 64, 64, 4
    $region9: #{tpu_custom_call.1} parent=1 // pred_fallthru
      _
    // Predicated region
    $region10: #{tpu_custom_call.1} parent=1 // pred_check
      _
    $region11: #{tpu_custom_call.1} parent=1 // pred_check_branch
      %35 = sbr.rel (0) target = $region13
    $region12: #{tpu_custom_call.1} parent=1 // pred_region
      %36 = dma.done [#allocation5], 128
    $region13: #{tpu_custom_call.1} parent=1 // pred_fallthru
      _
    // Predicated region
    $region14: #{tpu_custom_call.1} parent=1 // pred_check
      _
    $region15: #{tpu_custom_call.1} parent=1 // pred_check_branch
      %38 = sbr.rel (0) target = $region17
    $region16: #{tpu_custom_call.1} parent=1 // pred_region
      %39 = dma.done [#allocation8], 128
    $region17: #{tpu_custom_call.1} parent=1 // pred_fallthru
      _
    %p41 = scmp.eq.s32.totalorder 0, 0
    // Predicated region
    $region18: #{tpu_custom_call.1} parent=1 // pred_check
      %p42 = pneg %p41
    $region19: #{tpu_custom_call.1} parent=1 // pred_check_branch
      %44 = sbr.rel (%p42) target = $region21
    $region20: #{tpu_custom_call.1} parent=1 // pred_region
      %45 = vst [vmem:[#allocation2] sm:$0xff] 0.0
      %46 = vst [vmem:[#allocation2 + $0x8] sm:$0xff] 0.0
      %47 = vst [vmem:[#allocation2 + $0x10] sm:$0xff] 0.0
      %48 = vst [vmem:[#allocation2 + $0x18] sm:$0xff] 0.0
      %49 = vst [vmem:[#allocation2 + $0x20] sm:$0xff] 0.0
      %50 = vst [vmem:[#allocation2 + $0x28] sm:$0xff] 0.0
      %51 = vst [vmem:[#allocation2 + $0x30] sm:$0xff] 0.0
      %52 = vst [vmem:[#allocation2 + $0x38] sm:$0xff] 0.0
      %53 = vst [vmem:[#allocation2 + $0x40] sm:$0xff] 0.0
      %54 = vst [vmem:[#allocation2 + $0x48] sm:$0xff] 0.0
      %55 = vst [vmem:[#allocation2 + $0x50] sm:$0xff] 0.0
      %56 = vst [vmem:[#allocation2 + $0x58] sm:$0xff] 0.0
      %57 = vst [vmem:[#allocation2 + $0x60] sm:$0xff] 0.0
      %58 = vst [vmem:[#allocation2 + $0x68] sm:$0xff] 0.0
      %59 = vst [vmem:[#allocation2 + $0x70] sm:$0xff] 0.0
      %60 = vst [vmem:[#allocation2 + $0x78] sm:$0xff] 0.0
      %61 = vst [vmem:[#allocation3] sm:$0xff] 0.0
    $region21: #{tpu_custom_call.1} parent=1 // pred_fallthru
      _
    %v62 = vld [vmem:[#allocation4] sm:$0xf]
    %v63 = vld [vmem:[#allocation4 + $0x4] sm:$0xf]
    %v64 = vld [vmem:[#allocation7] sm:$0xf]
    %v65 = vld [vmem:[#allocation7 + $0x4] sm:$0xf]
    %v66 = vunpack.c.l.bf16 %v62
    %v67 = vunpack.c.l.bf16 %v63
    %v68 = vunpack.c.l.bf16 %v64
    %v69 = vunpack.c.l.bf16 %v65
    %v70 = vld [vmem:[#allocation3] sm:$0x1]
    %v71 = vadd.f32 %v66, %v67
    %v72 = vrot.slane %v71, 4
    %v73 = vadd.f32 %v71, %v72
    %v74 = vrot.slane %v73, 2
    %v75 = vadd.f32 %v73, %v74
    %v76 = vrot.slane %v75, 1
    %v77 = vadd.f32 %v75, %v76
    %v78 = vadd.f32 %v70, %v77
    %79 = vst [vmem:[#allocation3] sm:$0x1] %v78
    %v80 = vld [vmem:[#allocation3 + $0x1] sm:$0x1]
    %v81 = vmul.f32 %v66, %v66
    %v82 = vmul.f32 %v67, %v67
    %v83 = vadd.f32 %v81, %v82
    %v84 = vrot.slane %v83, 4
    %v85 = vadd.f32 %v83, %v84
    %v86 = vrot.slane %v85, 2
    %v87 = vadd.f32 %v85, %v86
    %v88 = vrot.slane %v87, 1
    %v89 = vadd.f32 %v87, %v88
    %v90 = vadd.f32 %v80, %v89
    %91 = vst [vmem:[#allocation3 + $0x1] sm:$0x1] %v90
    %v92 = vld [vmem:[#allocation3 + $0x2] sm:$0x1]
    %v93 = vadd.f32 %v68, %v69
    %v94 = vrot.slane %v93, 4
    %v95 = vadd.f32 %v93, %v94
    %v96 = vrot.slane %v95, 2
    %v97 = vadd.f32 %v95, %v96
    %v98 = vrot.slane %v97, 1
    %v99 = vadd.f32 %v97, %v98
    %v100 = vadd.f32 %v92, %v99
    %101 = vst [vmem:[#allocation3 + $0x2] sm:$0x1] %v100
    %v102 = vld [vmem:[#allocation3 + $0x3] sm:$0x1]
    %v103 = vmul.f32 %v68, %v68
    %v104 = vmul.f32 %v69, %v69
    %v105 = vadd.f32 %v103, %v104
    %v106 = vrot.slane %v105, 4
    %v107 = vadd.f32 %v105, %v106
    %v108 = vrot.slane %v107, 2
    %v109 = vadd.f32 %v107, %v108
    %v110 = vrot.slane %v109, 1
    %v111 = vadd.f32 %v109, %v110
    %v112 = vadd.f32 %v102, %v111
    %113 = vst [vmem:[#allocation3 + $0x3] sm:$0x1] %v112
    %v114 = vld [vmem:[#allocation2] sm:$0xff]
    %v115 = vld [vmem:[#allocation2 + $0x8] sm:$0xff]
    %v116 = vld [vmem:[#allocation2 + $0x10] sm:$0xff]
    %v117 = vld [vmem:[#allocation2 + $0x18] sm:$0xff]
    %v118 = vld [vmem:[#allocation2 + $0x20] sm:$0xff]
    %v119 = vld [vmem:[#allocation2 + $0x28] sm:$0xff]
    %v120 = vld [vmem:[#allocation2 + $0x30] sm:$0xff]
    %v121 = vld [vmem:[#allocation2 + $0x38] sm:$0xff]
    %v122 = vld [vmem:[#allocation2 + $0x40] sm:$0xff]
    %v123 = vld [vmem:[#allocation2 + $0x48] sm:$0xff]
    %v124 = vld [vmem:[#allocation2 + $0x50] sm:$0xff]
    %v125 = vld [vmem:[#allocation2 + $0x58] sm:$0xff]
    %v126 = vld [vmem:[#allocation2 + $0x60] sm:$0xff]
    %v127 = vld [vmem:[#allocation2 + $0x68] sm:$0xff]
    %v128 = vld [vmem:[#allocation2 + $0x70] sm:$0xff]
    %v129 = vld [vmem:[#allocation2 + $0x78] sm:$0xff]
    %v132 = vunpack.c.l.b16 %v62
    %v133 = vunpack.c.l.b16 %v63
    %v134 = vpack.c.b16 %v133, %v132
    %136 = vxpose.xlu0.c.b16.start [1/8] %v134, 128
    %137 = vxpose.xlu0.c.b16.cont [2/8] 0, 128
    %138 = vxpose.xlu0.c.b16.cont [3/8] 0, 128
    %139 = vxpose.xlu0.c.b16.cont [4/8] 0, 128
    %140 = vxpose.xlu0.c.b16.cont [5/8] 0, 128
    %141 = vxpose.xlu0.c.b16.cont [6/8] 0, 128
    %142 = vxpose.xlu0.c.b16.cont [7/8] 0, 128
    %143 = vxpose.xlu0.c.b16.end [8/8] 0, 128
    %v144 = vpop.trf.xlu0
    %v145 = vpop.trf.xlu0
    %v146 = vpop.trf.xlu0
    %v147 = vpop.trf.xlu0
    %v148 = vpop.trf.xlu0
    %v149 = vpop.trf.xlu0
    %v150 = vpop.trf.xlu0
    %v151 = vpop.trf.xlu0
    %v154 = vunpack.c.l.b16 %v64
    %v155 = vunpack.c.l.b16 %v65
    %v156 = vpack.c.b16 %v155, %v154
    %vm158 = vcmask 130048
    %v160 = vsel %vm158, %v144, 0
    %v163 = vsel %vm158, %v145, 0
    %v166 = vsel %vm158, %v146, 0
    %v169 = vsel %vm158, %v147, 0
    %v172 = vsel %vm158, %v148, 0
    %v175 = vsel %vm158, %v149, 0
    %v178 = vsel %vm158, %v150, 0
    %v181 = vsel %vm158, %v151, 0
    %183 = vmatprep.subr.bf16.mxu0 0
    %184 = vmatpush1.bf16.msra.mxu0 %v156
    %185 = vmatprep.subr.bf16.mxu0 0
    %186 = vmatpush1.bf16.msra.mxu0 0
    %187 = vmatprep.subr.bf16.mxu0 0
    %188 = vmatpush1.bf16.msra.mxu0 0
    %189 = vmatprep.subr.bf16.mxu0 0
    %190 = vmatpush1.bf16.msra.mxu0 0
    %191 = vmatprep.subr.bf16.mxu0 0
    %192 = vmatpush1.bf16.msra.mxu0 0
    %193 = vmatprep.subr.bf16.mxu0 0
    %194 = vmatpush1.bf16.msra.mxu0 0
    %195 = vmatprep.subr.bf16.mxu0 0
    %196 = vmatpush1.bf16.msra.mxu0 0
    %197 = vmatprep.subr.bf16.mxu0 0
    %198 = vmatpush1.bf16.msra.mxu0 0
    %199 = vmatprep.subr.bf16.mxu0 0
    %200 = vmatpush1.bf16.msra.mxu0 0
    %201 = vmatprep.subr.bf16.mxu0 0
    %202 = vmatpush1.bf16.msra.mxu0 0
    %203 = vmatprep.subr.bf16.mxu0 0
    %204 = vmatpush1.bf16.msra.mxu0 0
    %205 = vmatprep.subr.bf16.mxu0 0
    %206 = vmatpush1.bf16.msra.mxu0 0
    %207 = vmatprep.subr.bf16.mxu0 0
    %208 = vmatpush1.bf16.msra.mxu0 0
    %209 = vmatprep.subr.bf16.mxu0 0
    %210 = vmatpush1.bf16.msra.mxu0 0
    %211 = vmatprep.subr.bf16.mxu0 0
    %212 = vmatpush1.bf16.msra.mxu0 0
    %213 = vmatprep.subr.bf16.mxu0 0
    %214 = vmatpush1.bf16.msra.mxu0 0
    %215 = vmatprep.mubr.bf16.mxu0 0
    %216 = vmatmul.mubr.bf16.gmra.mrb[0].mxu0 %v160
    %v217 = vpop.f32.mrb[0].mxu0
    %v218 = vadd.f32 0.0, %v217
    %v219 = vpop.f32.mrb[0].mxu0
    %v220 = vpop.f32.mrb[0].mxu0
    %v221 = vadd.f32 0.0, %v220
    %v222 = vpop.f32.mrb[0].mxu0
    %223 = vmatprep.mubr.bf16.mxu0 0
    %224 = vmatmul.mubr.bf16.gmra.mrb[0].mxu0 %v163
    %v225 = vpop.f32.mrb[0].mxu0
    %v226 = vadd.f32 0.0, %v225
    %v227 = vpop.f32.mrb[0].mxu0
    %v228 = vpop.f32.mrb[0].mxu0
    %v229 = vadd.f32 0.0, %v228
    %v230 = vpop.f32.mrb[0].mxu0
    %231 = vmatprep.mubr.bf16.mxu0 0
    %232 = vmatmul.mubr.bf16.gmra.mrb[0].mxu0 %v166
    %v233 = vpop.f32.mrb[0].mxu0
    %v234 = vadd.f32 0.0, %v233
    %v235 = vpop.f32.mrb[0].mxu0
    %v236 = vpop.f32.mrb[0].mxu0
    %v237 = vadd.f32 0.0, %v236
    %v238 = vpop.f32.mrb[0].mxu0
    %239 = vmatprep.mubr.bf16.mxu0 0
    %240 = vmatmul.mubr.bf16.gmra.mrb[0].mxu0 %v169
    %v241 = vpop.f32.mrb[0].mxu0
    %v242 = vadd.f32 0.0, %v241
    %v243 = vpop.f32.mrb[0].mxu0
    %v244 = vpop.f32.mrb[0].mxu0
    %v245 = vadd.f32 0.0, %v244
    %v246 = vpop.f32.mrb[0].mxu0
    %247 = vmatprep.mubr.bf16.mxu0 0
    %248 = vmatmul.mubr.bf16.gmra.mrb[0].mxu0 %v172
    %v249 = vpop.f32.mrb[0].mxu0
    %v250 = vadd.f32 0.0, %v249
    %v251 = vpop.f32.mrb[0].mxu0
    %v252 = vpop.f32.mrb[0].mxu0
    %v253 = vadd.f32 0.0, %v252
    %v254 = vpop.f32.mrb[0].mxu0
    %255 = vmatprep.mubr.bf16.mxu0 0
    %256 = vmatmul.mubr.bf16.gmra.mrb[0].mxu0 %v175
    %v257 = vpop.f32.mrb[0].mxu0
    %v258 = vadd.f32 0.0, %v257
    %v259 = vpop.f32.mrb[0].mxu0
    %v260 = vpop.f32.mrb[0].mxu0
    %v261 = vadd.f32 0.0, %v260
    %v262 = vpop.f32.mrb[0].mxu0
    %263 = vmatprep.mubr.bf16.mxu0 0
    %264 = vmatmul.mubr.bf16.gmra.mrb[0].mxu0 %v178
    %v265 = vpop.f32.mrb[0].mxu0
    %v266 = vadd.f32 0.0, %v265
    %v267 = vpop.f32.mrb[0].mxu0
    %v268 = vpop.f32.mrb[0].mxu0
    %v269 = vadd.f32 0.0, %v268
    %v270 = vpop.f32.mrb[0].mxu0
    %271 = vmatprep.mubr.bf16.mxu0 0
    %272 = vmatmul.mubr.bf16.gmra.mrb[0].mxu0 %v181
    %v273 = vpop.f32.mrb[0].mxu0
    %v274 = vadd.f32 0.0, %v273
    %v275 = vpop.f32.mrb[0].mxu0
    %v276 = vpop.f32.mrb[0].mxu0
    %v277 = vadd.f32 0.0, %v276
    %v278 = vpop.f32.mrb[0].mxu0
    %279 = vdwg.mxu0
    %v280 = vadd.f32 %v114, %v218
    %v281 = vadd.f32 %v115, %v221
    %v282 = vadd.f32 %v116, %v226
    %v283 = vadd.f32 %v117, %v229
    %v284 = vadd.f32 %v118, %v234
    %v285 = vadd.f32 %v119, %v237
    %v286 = vadd.f32 %v120, %v242
    %v287 = vadd.f32 %v121, %v245
    %v288 = vadd.f32 %v122, %v250
    %v289 = vadd.f32 %v123, %v253
    %v290 = vadd.f32 %v124, %v258
    %v291 = vadd.f32 %v125, %v261
    %v292 = vadd.f32 %v126, %v266
    %v293 = vadd.f32 %v127, %v269
    %v294 = vadd.f32 %v128, %v274
    %v295 = vadd.f32 %v129, %v277
    %296 = vst [vmem:[#allocation2] sm:$0xff] %v280
    %297 = vst [vmem:[#allocation2 + $0x8] sm:$0xff] %v281
    %298 = vst [vmem:[#allocation2 + $0x10] sm:$0xff] %v282
    %299 = vst [vmem:[#allocation2 + $0x18] sm:$0xff] %v283
    %300 = vst [vmem:[#allocation2 + $0x20] sm:$0xff] %v284
    %301 = vst [vmem:[#allocation2 + $0x28] sm:$0xff] %v285
    %302 = vst [vmem:[#allocation2 + $0x30] sm:$0xff] %v286
    %303 = vst [vmem:[#allocation2 + $0x38] sm:$0xff] %v287
    %304 = vst [vmem:[#allocation2 + $0x40] sm:$0xff] %v288
    %305 = vst [vmem:[#allocation2 + $0x48] sm:$0xff] %v289
    %306 = vst [vmem:[#allocation2 + $0x50] sm:$0xff] %v290
    %307 = vst [vmem:[#allocation2 + $0x58] sm:$0xff] %v291
    %308 = vst [vmem:[#allocation2 + $0x60] sm:$0xff] %v292
    %309 = vst [vmem:[#allocation2 + $0x68] sm:$0xff] %v293
    %310 = vst [vmem:[#allocation2 + $0x70] sm:$0xff] %v294
    %311 = vst [vmem:[#allocation2 + $0x78] sm:$0xff] %v295
    // Predicated region
    $region22: #{tpu_custom_call.1} parent=1 // pred_check
      %p312 = pneg %p41
    $region23: #{tpu_custom_call.1} parent=1 // pred_check_branch
      %314 = sbr.rel (%p312) target = $region25
    $region24: #{tpu_custom_call.1} parent=1 // pred_region
      %v315 = vld [vmem:[#allocation3] sm:$0x1]
      %v316 = vmul.f32 %v315, 0.0625
      %v317 = vld [vmem:[#allocation3 + $0x2] sm:$0x1]
      %v318 = vmul.f32 %v317, 0.0625
      %v319 = vld [vmem:[#allocation3 + $0x1] sm:$0x1]
      %v320 = vmul.f32 %v319, 0.0625
      %v321 = vmul.f32 %v316, %v316
      %v322 = vsub.f32 %v320, %v321
      %v323 = vmax.f32 %v322, 0.0
      %v324 = vld [vmem:[#allocation3 + $0x3] sm:$0x1]
      %v325 = vmul.f32 %v324, 0.0625
      %v326 = vmul.f32 %v318, %v318
      %v327 = vsub.f32 %v325, %v326
      %v328 = vmax.f32 %v327, 0.0
      %v329 = vadd.f32 %v323, 1e-05
      %v330 = vrsqrt.pop %v329
      %v331 = vmul.f32 %v330, 0.0625
      %v332 = vadd.f32 %v328, 1e-05
      %v333 = vrsqrt.pop %v332
      %334 = vxpose.xlu0.b32.start [1/16] %v316, 128
      %335 = vxpose.xlu0.b32.cont [2/16] 0.0, 128
      %336 = vxpose.xlu0.b32.cont [3/16] 0.0, 128
      %337 = vxpose.xlu0.b32.cont [4/16] 0.0, 128
      %338 = vxpose.xlu0.b32.cont [5/16] 0.0, 128
      %339 = vxpose.xlu0.b32.cont [6/16] 0.0, 128
      %340 = vxpose.xlu0.b32.cont [7/16] 0.0, 128
      %341 = vxpose.xlu0.b32.cont [8/16] 0.0, 128
      %342 = vxpose.xlu0.b32.cont [9/16] 0.0, 128
      %343 = vxpose.xlu0.b32.cont [10/16] 0.0, 128
      %344 = vxpose.xlu0.b32.cont [11/16] 0.0, 128
      %345 = vxpose.xlu0.b32.cont [12/16] 0.0, 128
      %346 = vxpose.xlu0.b32.cont [13/16] 0.0, 128
      %347 = vxpose.xlu0.b32.cont [14/16] 0.0, 128
      %348 = vxpose.xlu0.b32.cont [15/16] 0.0, 128
      %349 = vxpose.xlu0.b32.end [16/16] 0.0, 128
      %v350 = vpop.trf.xlu0
      %v351 = vpop.trf.xlu0
      %v352 = vpop.trf.xlu0
      %v353 = vpop.trf.xlu0
      %v354 = vpop.trf.xlu0
      %v355 = vpop.trf.xlu0
      %v356 = vpop.trf.xlu0
      %v357 = vpop.trf.xlu0
      %v358 = vpop.trf.xlu0
      %v359 = vpop.trf.xlu0
      %v360 = vpop.trf.xlu0
      %v361 = vpop.trf.xlu0
      %v362 = vpop.trf.xlu0
      %v363 = vpop.trf.xlu0
      %v364 = vpop.trf.xlu0
      %v365 = vpop.trf.xlu0
      %366 = vxpose.xlu0.b32.start [1/16] %v331, 128
      %367 = vxpose.xlu0.b32.cont [2/16] 0.0, 128
      %368 = vxpose.xlu0.b32.cont [3/16] 0.0, 128
      %369 = vxpose.xlu0.b32.cont [4/16] 0.0, 128
      %370 = vxpose.xlu0.b32.cont [5/16] 0.0, 128
      %371 = vxpose.xlu0.b32.cont [6/16] 0.0, 128
      %372 = vxpose.xlu0.b32.cont [7/16] 0.0, 128
      %373 = vxpose.xlu0.b32.cont [8/16] 0.0, 128
      %374 = vxpose.xlu0.b32.cont [9/16] 0.0, 128
      %375 = vxpose.xlu0.b32.cont [10/16] 0.0, 128
      %376 = vxpose.xlu0.b32.cont [11/16] 0.0, 128
      %377 = vxpose.xlu0.b32.cont [12/16] 0.0, 128
      %378 = vxpose.xlu0.b32.cont [13/16] 0.0, 128
      %379 = vxpose.xlu0.b32.cont [14/16] 0.0, 128
      %380 = vxpose.xlu0.b32.cont [15/16] 0.0, 128
      %381 = vxpose.xlu0.b32.end [16/16] 0.0, 128
      %v382 = vpop.trf.xlu0
      %v383 = vpop.trf.xlu0
      %v384 = vpop.trf.xlu0
      %v385 = vpop.trf.xlu0
      %v386 = vpop.trf.xlu0
      %v387 = vpop.trf.xlu0
      %v388 = vpop.trf.xlu0
      %v389 = vpop.trf.xlu0
      %v390 = vpop.trf.xlu0
      %v391 = vpop.trf.xlu0
      %v392 = vpop.trf.xlu0
      %v393 = vpop.trf.xlu0
      %v394 = vpop.trf.xlu0
      %v395 = vpop.trf.xlu0
      %v396 = vpop.trf.xlu0
      %v397 = vpop.trf.xlu0
      %v398 = vld [vmem:[#allocation2] sm:$0xff]
      %v399 = vld [vmem:[#allocation2 + $0x8] sm:$0xff]
      %v400 = vld [vmem:[#allocation2 + $0x10] sm:$0xff]
      %v401 = vld [vmem:[#allocation2 + $0x18] sm:$0xff]
      %v402 = vld [vmem:[#allocation2 + $0x20] sm:$0xff]
      %v403 = vld [vmem:[#allocation2 + $0x28] sm:$0xff]
      %v404 = vld [vmem:[#allocation2 + $0x30] sm:$0xff]
      %v405 = vld [vmem:[#allocation2 + $0x38] sm:$0xff]
      %v406 = vld [vmem:[#allocation2 + $0x40] sm:$0xff]
      %v407 = vld [vmem:[#allocation2 + $0x48] sm:$0xff]
      %v408 = vld [vmem:[#allocation2 + $0x50] sm:$0xff]
      %v409 = vld [vmem:[#allocation2 + $0x58] sm:$0xff]
      %v410 = vld [vmem:[#allocation2 + $0x60] sm:$0xff]
      %v411 = vld [vmem:[#allocation2 + $0x68] sm:$0xff]
      %v412 = vld [vmem:[#allocation2 + $0x70] sm:$0xff]
      %v413 = vld [vmem:[#allocation2 + $0x78] sm:$0xff]
      %415 = vset.pattern.permute.xlu0 0
      %416 = vperm.xlu0 %415, %v350
      %v417 = vpop.permute.xlu0 %416
      %420 = vset.pattern.permute.xlu0 0
      %421 = vperm.xlu0 %420, %v351
      %v422 = vpop.permute.xlu0 %421
      %425 = vset.pattern.permute.xlu0 0
      %426 = vperm.xlu0 %425, %v352
      %v427 = vpop.permute.xlu0 %426
      %430 = vset.pattern.permute.xlu0 0
      %431 = vperm.xlu0 %430, %v353
      %v432 = vpop.permute.xlu0 %431
      %435 = vset.pattern.permute.xlu0 0
      %436 = vperm.xlu0 %435, %v354
      %v437 = vpop.permute.xlu0 %436
      %440 = vset.pattern.permute.xlu0 0
      %441 = vperm.xlu0 %440, %v355
      %v442 = vpop.permute.xlu0 %441
      %445 = vset.pattern.permute.xlu0 0
      %446 = vperm.xlu0 %445, %v356
      %v447 = vpop.permute.xlu0 %446
      %450 = vset.pattern.permute.xlu0 0
      %451 = vperm.xlu0 %450, %v357
      %v452 = vpop.permute.xlu0 %451
      %455 = vset.pattern.permute.xlu0 0
      %456 = vperm.xlu0 %455, %v358
      %v457 = vpop.permute.xlu0 %456
      %460 = vset.pattern.permute.xlu0 0
      %461 = vperm.xlu0 %460, %v359
      %v462 = vpop.permute.xlu0 %461
      %465 = vset.pattern.permute.xlu0 0
      %466 = vperm.xlu0 %465, %v360
      %v467 = vpop.permute.xlu0 %466
      %470 = vset.pattern.permute.xlu0 0
      %471 = vperm.xlu0 %470, %v361
      %v472 = vpop.permute.xlu0 %471
      %475 = vset.pattern.permute.xlu0 0
      %476 = vperm.xlu0 %475, %v362
      %v477 = vpop.permute.xlu0 %476
      %480 = vset.pattern.permute.xlu0 0
      %481 = vperm.xlu0 %480, %v363
      %v482 = vpop.permute.xlu0 %481
      %485 = vset.pattern.permute.xlu0 0
      %486 = vperm.xlu0 %485, %v364
      %v487 = vpop.permute.xlu0 %486
      %490 = vset.pattern.permute.xlu0 0
      %491 = vperm.xlu0 %490, %v365
      %v492 = vpop.permute.xlu0 %491
      %v494 = vlaneseq
      %v495 = vshrl.u32 %v494, 7
      %v496 = vsub.s32 0, %v495
      %v497 = vrot.slane %v318, %v496
      %v498 = vmul.f32 %v417, %v497
      %v499 = vmul.f32 %v422, %v497
      %v500 = vmul.f32 %v427, %v497
      %v501 = vmul.f32 %v432, %v497
      %v502 = vmul.f32 %v437, %v497
      %v503 = vmul.f32 %v442, %v497
      %v504 = vmul.f32 %v447, %v497
      %v505 = vmul.f32 %v452, %v497
      %v506 = vmul.f32 %v457, %v497
      %v507 = vmul.f32 %v462, %v497
      %v508 = vmul.f32 %v467, %v497
      %v509 = vmul.f32 %v472, %v497
      %v510 = vmul.f32 %v477, %v497
      %v511 = vmul.f32 %v482, %v497
      %v512 = vmul.f32 %v487, %v497
      %v513 = vmul.f32 %v492, %v497
      %v514 = vmul.f32 %v498, 16.0
      %v515 = vmul.f32 %v499, 16.0
      %v516 = vmul.f32 %v500, 16.0
      %v517 = vmul.f32 %v501, 16.0
      %v518 = vmul.f32 %v502, 16.0
      %v519 = vmul.f32 %v503, 16.0
      %v520 = vmul.f32 %v504, 16.0
      %v521 = vmul.f32 %v505, 16.0
      %v522 = vmul.f32 %v506, 16.0
      %v523 = vmul.f32 %v507, 16.0
      %v524 = vmul.f32 %v508, 16.0
      %v525 = vmul.f32 %v509, 16.0
      %v526 = vmul.f32 %v510, 16.0
      %v527 = vmul.f32 %v511, 16.0
      %v528 = vmul.f32 %v512, 16.0
      %v529 = vmul.f32 %v513, 16.0
      %v530 = vsub.f32 %v398, %v514
      %v531 = vsub.f32 %v399, %v515
      %v532 = vsub.f32 %v400, %v516
      %v533 = vsub.f32 %v401, %v517
      %v534 = vsub.f32 %v402, %v518
      %v535 = vsub.f32 %v403, %v519
      %v536 = vsub.f32 %v404, %v520
      %v537 = vsub.f32 %v405, %v521
      %v538 = vsub.f32 %v406, %v522
      %v539 = vsub.f32 %v407, %v523
      %v540 = vsub.f32 %v408, %v524
      %v541 = vsub.f32 %v409, %v525
      %v542 = vsub.f32 %v410, %v526
      %v543 = vsub.f32 %v411, %v527
      %v544 = vsub.f32 %v412, %v528
      %v545 = vsub.f32 %v413, %v529
      %547 = vset.pattern.permute.xlu0 0
      %548 = vperm.xlu0 %547, %v382
      %v549 = vpop.permute.xlu0 %548
      %552 = vset.pattern.permute.xlu0 0
      %553 = vperm.xlu0 %552, %v383
      %v554 = vpop.permute.xlu0 %553
      %557 = vset.pattern.permute.xlu0 0
      %558 = vperm.xlu0 %557, %v384
      %v559 = vpop.permute.xlu0 %558
      %562 = vset.pattern.permute.xlu0 0
      %563 = vperm.xlu0 %562, %v385
      %v564 = vpop.permute.xlu0 %563
      %567 = vset.pattern.permute.xlu0 0
      %568 = vperm.xlu0 %567, %v386
      %v569 = vpop.permute.xlu0 %568
      %572 = vset.pattern.permute.xlu0 0
      %573 = vperm.xlu0 %572, %v387
      %v574 = vpop.permute.xlu0 %573
      %577 = vset.pattern.permute.xlu0 0
      %578 = vperm.xlu0 %577, %v388
      %v579 = vpop.permute.xlu0 %578
      %582 = vset.pattern.permute.xlu0 0
      %583 = vperm.xlu0 %582, %v389
      %v584 = vpop.permute.xlu0 %583
      %587 = vset.pattern.permute.xlu0 0
      %588 = vperm.xlu0 %587, %v390
      %v589 = vpop.permute.xlu0 %588
      %592 = vset.pattern.permute.xlu0 0
      %593 = vperm.xlu0 %592, %v391
      %v594 = vpop.permute.xlu0 %593
      %597 = vset.pattern.permute.xlu0 0
      %598 = vperm.xlu0 %597, %v392
      %v599 = vpop.permute.xlu0 %598
      %602 = vset.pattern.permute.xlu0 0
      %603 = vperm.xlu0 %602, %v393
      %v604 = vpop.permute.xlu0 %603
      %607 = vset.pattern.permute.xlu0 0
      %608 = vperm.xlu0 %607, %v394
      %v609 = vpop.permute.xlu0 %608
      %612 = vset.pattern.permute.xlu0 0
      %613 = vperm.xlu0 %612, %v395
      %v614 = vpop.permute.xlu0 %613
      %617 = vset.pattern.permute.xlu0 0
      %618 = vperm.xlu0 %617, %v396
      %v619 = vpop.permute.xlu0 %618
      %622 = vset.pattern.permute.xlu0 0
      %623 = vperm.xlu0 %622, %v397
      %v624 = vpop.permute.xlu0 %623
      %v626 = vmul.f32 %v530, %v549
      %v627 = vmul.f32 %v531, %v554
      %v628 = vmul.f32 %v532, %v559
      %v629 = vmul.f32 %v533, %v564
      %v630 = vmul.f32 %v534, %v569
      %v631 = vmul.f32 %v535, %v574
      %v632 = vmul.f32 %v536, %v579
      %v633 = vmul.f32 %v537, %v584
      %v634 = vmul.f32 %v538, %v589
      %v635 = vmul.f32 %v539, %v594
      %v636 = vmul.f32 %v540, %v599
      %v637 = vmul.f32 %v541, %v604
      %v638 = vmul.f32 %v542, %v609
      %v639 = vmul.f32 %v543, %v614
      %v640 = vmul.f32 %v544, %v619
      %v641 = vmul.f32 %v545, %v624
      %v642 = vlaneseq
      %v643 = vshrl.u32 %v642, 7
      %v644 = vsub.s32 0, %v643
      %v645 = vrot.slane %v333, %v644
      %v646 = vmul.f32 %v626, %v645
      %v647 = vmul.f32 %v627, %v645
      %v648 = vmul.f32 %v628, %v645
      %v649 = vmul.f32 %v629, %v645
      %v650 = vmul.f32 %v630, %v645
      %v651 = vmul.f32 %v631, %v645
      %v652 = vmul.f32 %v632, %v645
      %v653 = vmul.f32 %v633, %v645
      %v654 = vmul.f32 %v634, %v645
      %v655 = vmul.f32 %v635, %v645
      %v656 = vmul.f32 %v636, %v645
      %v657 = vmul.f32 %v637, %v645
      %v658 = vmul.f32 %v638, %v645
      %v659 = vmul.f32 %v639, %v645
      %v660 = vmul.f32 %v640, %v645
      %v661 = vmul.f32 %v641, %v645
      %v662 = vlaneseq
      %v663 = vshrl.u32 %v662, 7
      %v664 = vadd.s32 %v663, 8
      %v665 = vadd.s32 %v663, 16
      %v666 = vadd.s32 %v663, 24
      %v667 = vadd.s32 %v663, 32
      %v668 = vadd.s32 %v663, 40
      %v669 = vadd.s32 %v663, 48
      %v670 = vadd.s32 %v663, 56
      %v671 = vadd.s32 %v663, 64
      %v672 = vadd.s32 %v663, 72
      %v673 = vadd.s32 %v663, 80
      %v674 = vadd.s32 %v663, 88
      %v675 = vadd.s32 %v663, 96
      %v676 = vadd.s32 %v663, 104
      %v677 = vadd.s32 %v663, 112
      %v678 = vadd.s32 %v663, 120
      %v679 = vlaneseq
      %v680 = vand.u32 %v679, 127
      %s681 = smul.u32 0, 128
      %v682 = vstv %s681
      %v683 = vadd.s32 %v680, %v682
      %vm684 = vcmp.eq.s32.totalorder %v663, %v683
      %vm685 = vcmp.eq.s32.totalorder %v664, %v683
      %vm686 = vcmp.eq.s32.totalorder %v665, %v683
      %vm687 = vcmp.eq.s32.totalorder %v666, %v683
      %vm688 = vcmp.eq.s32.totalorder %v667, %v683
      %vm689 = vcmp.eq.s32.totalorder %v668, %v683
      %vm690 = vcmp.eq.s32.totalorder %v669, %v683
      %vm691 = vcmp.eq.s32.totalorder %v670, %v683
      %vm692 = vcmp.eq.s32.totalorder %v671, %v683
      %vm693 = vcmp.eq.s32.totalorder %v672, %v683
      %vm694 = vcmp.eq.s32.totalorder %v673, %v683
      %vm695 = vcmp.eq.s32.totalorder %v674, %v683
      %vm696 = vcmp.eq.s32.totalorder %v675, %v683
      %vm697 = vcmp.eq.s32.totalorder %v676, %v683
      %vm698 = vcmp.eq.s32.totalorder %v677, %v683
      %vm699 = vcmp.eq.s32.totalorder %v678, %v683
      %vm700 = vcmp.lt.s32.totalorder %v683, 32
      %vm701 = vmand %vm684, %vm700
      %vm702 = vmand %vm685, %vm700
      %vm703 = vmand %vm686, %vm700
      %vm704 = vmand %vm687, %vm700
      %vm705 = vmand %vm688, %vm700
      %vm706 = vmand %vm689, %vm700
      %vm707 = vmand %vm690, %vm700
      %vm708 = vmand %vm691, %vm700
      %vm709 = vmand %vm692, %vm700
      %vm710 = vmand %vm693, %vm700
      %vm711 = vmand %vm694, %vm700
      %vm712 = vmand %vm695, %vm700
      %vm713 = vmand %vm696, %vm700
      %vm714 = vmand %vm697, %vm700
      %vm715 = vmand %vm698, %vm700
      %vm716 = vmand %vm699, %vm700
      %v717 = vsel %vm701, 1, 0
      %v718 = vsel %vm702, 1, 0
      %v719 = vsel %vm703, 1, 0
      %v720 = vsel %vm704, 1, 0
      %v721 = vsel %vm705, 1, 0
      %v722 = vsel %vm706, 1, 0
      %v723 = vsel %vm707, 1, 0
      %v724 = vsel %vm708, 1, 0
      %v725 = vsel %vm709, 1, 0
      %v726 = vsel %vm710, 1, 0
      %v727 = vsel %vm711, 1, 0
      %v728 = vsel %vm712, 1, 0
      %v729 = vsel %vm713, 1, 0
      %v730 = vsel %vm714, 1, 0
      %v731 = vsel %vm715, 1, 0
      %v732 = vsel %vm716, 1, 0
      %v733 = vcvt.s32.f32 %v717
      %v734 = vcvt.s32.f32 %v718
      %v735 = vcvt.s32.f32 %v719
      %v736 = vcvt.s32.f32 %v720
      %v737 = vcvt.s32.f32 %v721
      %v738 = vcvt.s32.f32 %v722
      %v739 = vcvt.s32.f32 %v723
      %v740 = vcvt.s32.f32 %v724
      %v741 = vcvt.s32.f32 %v725
      %v742 = vcvt.s32.f32 %v726
      %v743 = vcvt.s32.f32 %v727
      %v744 = vcvt.s32.f32 %v728
      %v745 = vcvt.s32.f32 %v729
      %v746 = vcvt.s32.f32 %v730
      %v747 = vcvt.s32.f32 %v731
      %v748 = vcvt.s32.f32 %v732
      %v749 = vmul.f32 %v733, 0.995
      %v750 = vmul.f32 %v734, 0.995
      %v751 = vmul.f32 %v735, 0.995
      %v752 = vmul.f32 %v736, 0.995
      %v753 = vmul.f32 %v737, 0.995
      %v754 = vmul.f32 %v738, 0.995
      %v755 = vmul.f32 %v739, 0.995
      %v756 = vmul.f32 %v740, 0.995
      %v757 = vmul.f32 %v741, 0.995
      %v758 = vmul.f32 %v742, 0.995
      %v759 = vmul.f32 %v743, 0.995
      %v760 = vmul.f32 %v744, 0.995
      %v761 = vmul.f32 %v745, 0.995
      %v762 = vmul.f32 %v746, 0.995
      %v763 = vmul.f32 %v747, 0.995
      %v764 = vmul.f32 %v748, 0.995
      %v765 = vadd.f32 %v749, 0.005
      %v766 = vadd.f32 %v750, 0.005
      %v767 = vadd.f32 %v751, 0.005
      %v768 = vadd.f32 %v752, 0.005
      %v769 = vadd.f32 %v753, 0.005
      %v770 = vadd.f32 %v754, 0.005
      %v771 = vadd.f32 %v755, 0.005
      %v772 = vadd.f32 %v756, 0.005
      %v773 = vadd.f32 %v757, 0.005
      %v774 = vadd.f32 %v758, 0.005
      %v775 = vadd.f32 %v759, 0.005
      %v776 = vadd.f32 %v760, 0.005
      %v777 = vadd.f32 %v761, 0.005
      %v778 = vadd.f32 %v762, 0.005
      %v779 = vadd.f32 %v763, 0.005
      %v780 = vadd.f32 %v764, 0.005
      %v781 = vsub.f32 %v646, %v733
      %v782 = vsub.f32 %v647, %v734
      %v783 = vsub.f32 %v648, %v735
      %v784 = vsub.f32 %v649, %v736
      %v785 = vsub.f32 %v650, %v737
      %v786 = vsub.f32 %v651, %v738
      %v787 = vsub.f32 %v652, %v739
      %v788 = vsub.f32 %v653, %v740
      %v789 = vsub.f32 %v654, %v741
      %v790 = vsub.f32 %v655, %v742
      %v791 = vsub.f32 %v656, %v743
      %v792 = vsub.f32 %v657, %v744
      %v793 = vsub.f32 %v658, %v745
      %v794 = vsub.f32 %v659, %v746
      %v795 = vsub.f32 %v660, %v747
      %v796 = vsub.f32 %v661, %v748
      %v797 = vmul.f32 %v765, %v781
      %v798 = vmul.f32 %v766, %v782
      %v799 = vmul.f32 %v767, %v783
      %v800 = vmul.f32 %v768, %v784
      %v801 = vmul.f32 %v769, %v785
      %v802 = vmul.f32 %v770, %v786
      %v803 = vmul.f32 %v771, %v787
      %v804 = vmul.f32 %v772, %v788
      %v805 = vmul.f32 %v773, %v789
      %v806 = vmul.f32 %v774, %v790
      %v807 = vmul.f32 %v775, %v791
      %v808 = vmul.f32 %v776, %v792
      %v809 = vmul.f32 %v777, %v793
      %v810 = vmul.f32 %v778, %v794
      %v811 = vmul.f32 %v779, %v795
      %v812 = vmul.f32 %v780, %v796
      %v813 = vmul.f32 %v797, %v781
      %v814 = vmul.f32 %v798, %v782
      %v815 = vmul.f32 %v799, %v783
      %v816 = vmul.f32 %v800, %v784
      %v817 = vmul.f32 %v801, %v785
      %v818 = vmul.f32 %v802, %v786
      %v819 = vmul.f32 %v803, %v787
      %v820 = vmul.f32 %v804, %v788
      %v821 = vmul.f32 %v805, %v789
      %v822 = vmul.f32 %v806, %v790
      %v823 = vmul.f32 %v807, %v791
      %v824 = vmul.f32 %v808, %v792
      %v825 = vmul.f32 %v809, %v793
      %v826 = vmul.f32 %v810, %v794
      %v827 = vmul.f32 %v811, %v795
      %v828 = vmul.f32 %v812, %v796
      %v829 = vadd.f32 %v813, %v814
      %v830 = vadd.f32 %v829, %v815
      %v831 = vadd.f32 %v830, %v816
      %v832 = vadd.f32 %v831, %v817
      %v833 = vadd.f32 %v832, %v818
      %v834 = vadd.f32 %v833, %v819
      %v835 = vadd.f32 %v834, %v820
      %v836 = vadd.f32 %v835, %v821
      %v837 = vadd.f32 %v836, %v822
      %v838 = vadd.f32 %v837, %v823
      %v839 = vadd.f32 %v838, %v824
      %v840 = vadd.f32 %v839, %v825
      %v841 = vadd.f32 %v840, %v826
      %v842 = vadd.f32 %v841, %v827
      %v843 = vadd.f32 %v842, %v828
      %844 = vadd.xlane.f32.xlu0 %v843
      %v845 = vpop.xlane.xlu0 %844
      %v846 = vrot.slane %v845, 4
      %v847 = vadd.f32 %v845, %v846
      %v848 = vrot.slane %v847, 2
      %v849 = vadd.f32 %v847, %v848
      %v850 = vrot.slane %v849, 1
      %v851 = vadd.f32 %v849, %v850
      %s852 = vtos %v851
      %s853 = scalar_lea.smem [#allocation9], 0
      %854 = sst [smem:[%s853]] %s852
    $region25: #{tpu_custom_call.1} parent=1 // pred_fallthru
      _
    // Predicated region
    $region26: #{tpu_custom_call.1} parent=1 // pred_check
      _
    $region27: #{tpu_custom_call.1} parent=1 // pred_check_branch
      %856 = sbr.rel (0) target = $region29
    $region28: #{tpu_custom_call.1} parent=1 // pred_region
      %s858 = ssub.s32 16, 16
      %859 = vsyncadd [#allocation6], %s858
      %862 = dma.smem_to_hbm [#allocation9], 16, %s2, [#allocation6]
    $region29: #{tpu_custom_call.1} parent=1 // pred_fallthru
      _
    // Predicated region
    $region30: #{tpu_custom_call.1} parent=1 // pred_check
      _
    $region31: #{tpu_custom_call.1} parent=1 // pred_check_branch
      %864 = sbr.rel (0) target = $region33
    $region32: #{tpu_custom_call.1} parent=1 // pred_region
      %865 = dma.done [#allocation6], 16
    $region33: #{tpu_custom_call.1} parent=1 // pred_fallthru
      _
    %866 = sfence
    %867 = vsyncpa [#allocation5], 1
    %868 = vsyncpa [#allocation8], 1
    %869 = vsyncpa [#allocation6], 1

</llo_original>
